<compile_context>
chip_gen: v7x
topology: tpu7x:2x2x1
jax: 0.10.0
libtpu: 0.0.40
codegen_flags: <defaults>
</compile_context>

<pallas_src>
import jax
import jax.numpy as jnp
from jax.experimental import pallas as pl
from jax.experimental.pallas import tpu as pltpu


def _round_up(n, m):
    return (n + m - 1) // m * m


def _vmem_ceiling_bytes():
    """Usable per-call VMEM budget derived from the actual chip, with headroom."""
    try:
        cap = int(pltpu.get_tpu_info().vmem_capacity_bytes)
    except Exception:
        cap = None
    if not cap or cap <= 0:
        cap = 64 << 20                      # conservative (v7x-sized) fallback
    return max(cap - (24 << 20), 16 << 20)  # 128 MiB -> ~104 MiB, 64 MiB -> 40 MiB


# --------------------------------------------------------------------------- #
# Fused single-pass kernel: sum over L, k-tap channel conv, sigmoid, multiply. #
# --------------------------------------------------------------------------- #
def _eca_fused_kernel(w_ref, x_ref, o_ref):
    # w_ref: (K,) f32 in SMEM (scalar prefetch), taps already scaled by 1/L
    # x_ref: (Tb, C, L) native dtype
    # o_ref: (Tb, C, L) native dtype
    k_size = w_ref.shape[0]
    pad = (k_size - 1) // 2
    tb, chans, _ = x_ref.shape

    x = x_ref[...]                                              # native dtype, no f32 copy
    # Channel sums (== mean * L); keepdims keeps channels on the sublane axis so
    # the final gate broadcast over L is a cheap lane broadcast.
    s = jnp.sum(x, axis=-1, keepdims=True, dtype=jnp.float32)   # (Tb, C, 1)

    # k-tap conv over channels: y[c] = sum_t w[t] * s[c + t - pad], zero-padded
    # edges.  Shift via XLU roll + iota edge mask (no concat temp, no slices).
    c_idx = jax.lax.broadcasted_iota(jnp.int32, (tb, chans, 1), 1)
    y = jnp.zeros((tb, chans, 1), jnp.float32)
    for t in range(k_size):                                     # k is tiny & static
        d = t - pad                                             # source offset c + d
        w_t = w_ref[t]                                          # SMEM scalar
        if d == 0:
            y = y + w_t * s
        else:
            shifted = pltpu.roll(s, shift=(-d) % chans, axis=1)  # shifted[c]=s[(c+d)%C]
            valid = (c_idx >= -d) & (c_idx < chans - d)          # 0 <= c+d < C
            y = y + w_t * jnp.where(valid, shifted, 0.0)

    gate = jax.nn.sigmoid(y)                                    # (Tb, C, 1) f32, via EUP
    o_ref[...] = (x * gate.astype(x.dtype)).astype(o_ref.dtype)


# --------------------------------------------------------------------------- #
# Fallback multiply kernel for slabs that cannot fit the VMEM budget.          #
# --------------------------------------------------------------------------- #
def _eca_apply_kernel(g_ref, x_ref, o_ref):
    # g_ref: (1, C, 1) precomputed gate (x dtype); x_ref/o_ref: (1, C, Tl)
    o_ref[...] = x_ref[...] * g_ref[...]


def _eca_fallback(x, conv_weight, ceiling):
    # TODO(synk): halo'd channel-tile single-pass kernel would avoid the extra
    # HBM read of x that the gate precompute below incurs.
    B, C, L = x.shape
    k_size = conv_weight.shape[0]
    pad = (k_size - 1) // 2
    itemsize = x.dtype.itemsize

    # Tiny (B, C) gate: mean over L, k-tap channel conv, sigmoid.
    s = jnp.mean(x, axis=-1, dtype=jnp.float32)                 # (B, C)
    w = conv_weight.astype(jnp.float32)
    s_pad = jnp.pad(s, ((0, 0), (pad, pad)))
    y = jnp.zeros_like(s)
    for t in range(k_size):
        y = y + w[t] * s_pad[:, t:t + C]
    gate3 = jax.nn.sigmoid(y).astype(x.dtype)[:, :, None]       # (B, C, 1)

    slack = 2 << 20
    max_tl = max(128, ((ceiling - slack) // (4 * C * itemsize)) // 128 * 128)
    tl = max(128, min(_round_up(L, 128), max_tl))
    grid = (B, pl.cdiv(L, tl))
    vmem_limit = int(min(ceiling, max(4 * C * tl * itemsize + slack, 16 << 20)))

    return pl.pallas_call(
        _eca_apply_kernel,
        out_shape=jax.ShapeDtypeStruct((B, C, L), x.dtype),
        grid_spec=pltpu.PrefetchScalarGridSpec(
            num_scalar_prefetch=0,
            grid=grid,
            in_specs=[
                pl.BlockSpec((1, C, 1), lambda b, l: (b, 0, 0)),   # gate
                pl.BlockSpec((1, C, tl), lambda b, l: (b, 0, l)),  # x tile
            ],
            out_specs=pl.BlockSpec((1, C, tl), lambda b, l: (b, 0, l)),
        ),
        compiler_params=pltpu.CompilerParams(
            dimension_semantics=("parallel", "parallel"),
            vmem_limit_bytes=vmem_limit,
        ),
    )(gate3, x)


@jax.jit
def eca_block(x, conv_weight):
    """x: (B, C, L); conv_weight: (k_size,). Returns (B, C, L), same dtype as x."""
    B, C, L = x.shape
    k_size = conv_weight.shape[0]
    assert k_size % 2 == 1, "ECA uses an odd kernel size (padding=(k-1)//2)"

    itemsize = x.dtype.itemsize
    ceiling = _vmem_ceiling_bytes()
    slack = 2 << 20
    # Per-batch-row VMEM footprint: in + out blocks double-buffered (4x), plus a
    # possible f32-widened reduce temp for sub-32-bit inputs (budgeted, not assumed away).
    widen = 4 if itemsize < 4 else 0
    per_b = C * L * (4 * itemsize + widen)
    max_tb = (ceiling - slack) // per_b if per_b > 0 else 0

    if max_tb < 1:
        # Single-batch slab does not fit VMEM (mainly huge C*L on v7x's 64 MiB).
        return _eca_fallback(x, conv_weight, ceiling)

    # Batch folding: as many batch rows per grid step as the budget allows, but
    # keep >= 2 grid steps when B >= 2 so both v7x TensorCores get work.
    tb = int(min(B, max_tb))
    if B >= 2:
        tb = min(tb, (B + 1) // 2)
    tb = max(tb, 1)
    grid_b = pl.cdiv(B, tb)

    # Fold the 1/L of the adaptive avg pool into the conv taps (K f32 scalars in SMEM).
    w_scaled = conv_weight.astype(jnp.float32) / jnp.float32(L)

    vmem_limit = int(min(ceiling, max(tb * per_b + slack, 16 << 20)))

    return pl.pallas_call(
        _eca_fused_kernel,
        out_shape=jax.ShapeDtypeStruct((B, C, L), x.dtype),
        grid_spec=pltpu.PrefetchScalarGridSpec(
            num_scalar_prefetch=1,                               # taps -> SMEM
            grid=(grid_b,),
            in_specs=[pl.BlockSpec((tb, C, L), lambda b, w: (b, 0, 0))],
            out_specs=pl.BlockSpec((tb, C, L), lambda b, w: (b, 0, 0)),
        ),
        compiler_params=pltpu.CompilerParams(
            dimension_semantics=("parallel",),
            vmem_limit_bytes=vmem_limit,
        ),
    )(w_scaled, x)


def eca_reference(x, conv_weight):
    """Pure-JAX reference replicating the PyTorch forward exactly."""
    k_size = conv_weight.shape[0]
    pad = (k_size - 1) // 2
    avg = jnp.mean(x, axis=-1)                         # (B, C)
    yt = avg[:, None, :]                               # (B, 1, C)
    w3 = conv_weight.reshape(1, 1, k_size)             # (O=1, I=1, K)
    conv = jax.lax.conv_general_dilated(
        yt, w3, window_strides=(1,), padding=[(pad, pad)],
        dimension_numbers=("NCH", "OIH", "NCH"))       # (B, 1, C)
    y = jax.nn.sigmoid(conv[:, 0, :])                  # (B, C)
    return x * y[:, :, None]


if __name__ == "__main__":
    B, C, L = 2, 8, 16
    K_SIZE = 3

    key = jax.random.PRNGKey(0)
    kx, kw = jax.random.split(key)
    x = jax.random.normal(kx, (B, C, L), dtype=jnp.float32)

    # Deterministic Conv1d(1, 1, k_size, bias=False) weight (PyTorch-style uniform bound).
    bound = 1.0 / (1 * K_SIZE) ** 0.5
    conv_weight = jax.random.uniform(kw, (K_SIZE,), jnp.float32, -bound, bound)

    out = jax.block_until_ready(eca_block(x, conv_weight))
    ref = eca_reference(x, conv_weight)

    assert out.shape == (B, C, L)
    assert jnp.allclose(out, ref, atol=1e-5, rtol=1e-5), "mismatch vs reference"

    print("KERNEL_OK")
</pallas_src>

<mosaic_0001>
module attributes {stable_mosaic.version = 11 : i64} {
  func.func @_eca_fused_kernel(%arg0: i32, %arg1: memref<3xf32, #tpu.memory_space<smem>>, %arg2: memref<1x8x16xf32, #tpu.memory_space<vmem>>, %arg3: memref<1x8x16xf32, #tpu.memory_space<vmem>>) attributes {dimension_semantics = [#tpu.dimension_semantics<parallel>], iteration_bounds = array<i64: 2>, scalar_prefetch = 1 : i64, scratch_operands = 0 : i64, tpu.core_type = #tpu.core_type<tc>, window_params = [{transform_indices = @transform_0, window_bounds = array<i64: 1, 8, 16>}, {transform_indices = @transform_1, window_bounds = array<i64: 1, 8, 16>}]} {
    %c0 = arith.constant 0 : index
    %c0_0 = arith.constant 0 : index
    %c0_1 = arith.constant 0 : index
    %0 = vector.load %arg2[%c0, %c0_0, %c0_1] : memref<1x8x16xf32, #tpu.memory_space<vmem>>, vector<1x8x16xf32>
    %cst = arith.constant dense<0.000000e+00> : vector<1x8xf32>
    %1 = vector.multi_reduction <add>, %0, %cst [2] : vector<1x8x16xf32> to vector<1x8xf32>
    %2 = vector.shape_cast %1 : vector<1x8xf32> to vector<1x8x1xf32>
    %3 = tpu.iota {dimensions = array<i32: 1>} : vector<1x8x1xi32>
    %cst_2 = arith.constant 0.000000e+00 : f32
    %4 = vector.broadcast %cst_2 : f32 to vector<1x8x1xf32>
    %c0_3 = arith.constant 0 : index
    %5 = memref.load %arg1[%c0_3] : memref<3xf32, #tpu.memory_space<smem>>
    %c1_i32 = arith.constant 1 : i32
    %6 = tpu.dynamic_rotate %2 by %c1_i32 dim 1 : vector<1x8x1xf32>, i32 -> vector<1x8x1xf32>
    %c1_i32_4 = arith.constant 1 : i32
    %7 = vector.broadcast %c1_i32_4 : i32 to vector<1x8x1xi32>
    %8 = arith.cmpi sge, %3, %7 : vector<1x8x1xi32>
    %c9_i32 = arith.constant 9 : i32
    %9 = vector.broadcast %c9_i32 : i32 to vector<1x8x1xi32>
    %10 = arith.cmpi slt, %3, %9 : vector<1x8x1xi32>
    %11 = arith.andi %8, %10 : vector<1x8x1xi1>
    %cst_5 = arith.constant 0.000000e+00 : f32
    %12 = vector.broadcast %cst_5 : f32 to vector<1x8x1xf32>
    %13 = arith.select %11, %6, %12 : vector<1x8x1xi1>, vector<1x8x1xf32>
    %14 = vector.broadcast %5 : f32 to vector<1x8x1xf32>
    %15 = arith.mulf %14, %13 : vector<1x8x1xf32>
    %16 = arith.addf %4, %15 : vector<1x8x1xf32>
    %c1 = arith.constant 1 : index
    %17 = memref.load %arg1[%c1] : memref<3xf32, #tpu.memory_space<smem>>
    %18 = vector.broadcast %17 : f32 to vector<1x8x1xf32>
    %19 = arith.mulf %18, %2 : vector<1x8x1xf32>
    %20 = arith.addf %16, %19 : vector<1x8x1xf32>
    %c2 = arith.constant 2 : index
    %21 = memref.load %arg1[%c2] : memref<3xf32, #tpu.memory_space<smem>>
    %c7_i32 = arith.constant 7 : i32
    %22 = tpu.dynamic_rotate %2 by %c7_i32 dim 1 : vector<1x8x1xf32>, i32 -> vector<1x8x1xf32>
    %c-1_i32 = arith.constant -1 : i32
    %23 = vector.broadcast %c-1_i32 : i32 to vector<1x8x1xi32>
    %24 = arith.cmpi sge, %3, %23 : vector<1x8x1xi32>
    %c7_i32_6 = arith.constant 7 : i32
    %25 = vector.broadcast %c7_i32_6 : i32 to vector<1x8x1xi32>
    %26 = arith.cmpi slt, %3, %25 : vector<1x8x1xi32>
    %27 = arith.andi %24, %26 : vector<1x8x1xi1>
    %cst_7 = arith.constant 0.000000e+00 : f32
    %28 = vector.broadcast %cst_7 : f32 to vector<1x8x1xf32>
    %29 = arith.select %27, %22, %28 : vector<1x8x1xi1>, vector<1x8x1xf32>
    %30 = vector.broadcast %21 : f32 to vector<1x8x1xf32>
    %31 = arith.mulf %30, %29 : vector<1x8x1xf32>
    %32 = arith.addf %20, %31 : vector<1x8x1xf32>
    %33 = arith.negf %32 : vector<1x8x1xf32>
    %34 = math.exp %33 : vector<1x8x1xf32>
    %cst_8 = arith.constant 1.000000e+00 : f32
    %35 = vector.broadcast %cst_8 : f32 to vector<1x8x1xf32>
    %36 = arith.addf %35, %34 : vector<1x8x1xf32>
    %37 = arith.divf %35, %36 : vector<1x8x1xf32>
    %38 = vector.broadcast %37 : vector<1x8x1xf32> to vector<1x8x16xf32>
    %39 = arith.mulf %0, %38 : vector<1x8x16xf32>
    %c0_9 = arith.constant 0 : index
    %c0_10 = arith.constant 0 : index
    %c0_11 = arith.constant 0 : index
    %40 = vector.load %arg3[%c0_9, %c0_10, %c0_11] : memref<1x8x16xf32, #tpu.memory_space<vmem>>, vector<1x8x16xf32>
    tpu.vector_store %arg3[%c0_9, %c0_10, %c0_11], %39 {strides = array<i32>} : memref<1x8x16xf32, #tpu.memory_space<vmem>>, vector<1x8x16xf32>,
    return
  }
  func.func @transform_0(%arg0: i32, %arg1: memref<3xf32, #tpu.memory_space<smem>>) -> (i32, i32, i32) {
    %c0_i32 = arith.constant 0 : i32
    %c0_i32_0 = arith.constant 0 : i32
    %c0_i32_1 = arith.constant 0 : i32
    return %arg0, %c0_i32, %c0_i32_0 : i32, i32, i32
  }
  func.func @transform_1(%arg0: i32, %arg1: memref<3xf32, #tpu.memory_space<smem>>) -> (i32, i32, i32) {
    %c0_i32 = arith.constant 0 : i32
    %c0_i32_0 = arith.constant 0 : i32
    %c0_i32_1 = arith.constant 0 : i32
    return %arg0, %c0_i32, %c0_i32_0 : i32, i32, i32
  }
}

</mosaic_0001>

<llo_original>
// kernel: eca_block.1
$region0: #{eca_block.1}
  #allocation0 [shape = 'u32[]', space=smem, size = 0x4, offset = 0x4, fixed_abs, tag = 'smem constant byte address 0x4 - core index']
  #allocation1 [shape = 'u32[144,128]{1,0:T(1,128)}', space=vmem, size = 0x12000, scoped, tag = 'internal scratch']
  #allocation2 [shape = 's32[1]{0}', space=sflag, size = 0x4, scoped, tag = 'scoped memory for eca_block.1']
  #allocation3 [shape = 'u8[512]{0}', space=smem, size = 0x200, scoped, tag = 'prefetched SMEM operand 0']
  %s0 = inlined_call_operand.vmem [shape: f32[3], index: 0, kind: input, shape index: {}]
  %s1 = inlined_call_operand.hbm [shape: f32[2,8,16], index: 1, kind: input, shape index: {}]
  %s2 = inlined_call_operand.hbm [shape: f32[2,8,16], index: 2, kind: output, shape index: {}]
  %s3 = sld [smem:[#allocation0]]
  $region41: #{eca_block.1} parent=0
    _
  %s5 = ssub.s32 1, %s3
  %s6 = scalar_select 0, %s5, %s3
  %s7 = sshll.u32 %s0, 4
  %s8 = int_to_ptr.vmem [resolvable:$true] %s7
  %10 = dma.vmem_to_smem %s8, 16, [#allocation3], [#allocation2]
  %11 = dma.done [#allocation2], 16
  %12 = sfence
  $region1: #{eca_block.1} parent=0
    #allocation4 [shape = 'u8[8192]{0}', space=vmem, size = 0x2000, scoped, tag = 'input window, operand 1']
    #allocation5 [shape = 's32[2]{0}', space=sflag, size = 0x8, scoped, tag = 'scoped memory for eca_block.1']
    #allocation6 [shape = 's32[2]{0}', space=sflag, size = 0x8, scoped, tag = 'scoped memory for eca_block.1']
    #allocation7 [shape = 'u8[8192]{0}', space=vmem, size = 0x2000, scoped, tag = 'output window, operand 0']
    %13 = vsyncpa [#allocation5], 0
    %s14 = scalar_lea.sflag [#allocation5], 1
    %15 = vsyncpa %s14, 0
    %16 = vsyncpa [#allocation6], 0
    %s17 = scalar_lea.sflag [#allocation6], 1
    %18 = vsyncpa %s17, 0
    loop: start=0, step=1, limit=4
    $region2: #{eca_block.1} parent=1 // loop_pre_header
      _
    $region3: #{eca_block.1} parent=1 // loop_header
      %s20 = sphi 0, %s24
      %p21 = scmp.ge.s32.totalorder %s20, 4
      %s30 = sphi 0, %s32
      %s33 = sphi 0, %s30
      %s34 = sphi 0, %s33
      %s50 = sphi 0, %s34
      %s56 = sphi 0, %s58
      %s59 = sphi 0, %s56
      %s60 = sphi 0, %s59
      %s76 = sphi 0, %s60
    $region4: #{eca_block.1} parent=1 // loop_header_branch
      %23 = sbr.rel (%p21) target = $region8
    $region5: #{eca_block.1} parent=1 // loop_body
      %s25 = ssub.s32 %s20, 1
      %s26 = ssub.s32 %s20, 2
      %s27 = sadd.s32 %s20, 1
      %s28 = ssub.s32 %s20, %s27
      %p29 = scmp.eq.s32.totalorder %s28, 0
      %s31 = sadd.s32 %s30, 1
      %s32 = scalar_select %p29, %s30, %s31
      %p35 = pneg %p29
      %p36 = scmp.eq.s32.totalorder %s20, 1
      %p37 = por %p35, %p36
      %p38 = scmp.ne.s32.totalorder %s30, %s33
      %p39 = scmp.eq.s32.totalorder %s20, 0
      %p40 = por %p38, %p39
      %p41 = scmp.ne.s32.totalorder %s30, %s33
      %p42 = scmp.eq.s32.totalorder %s25, 1
      %p43 = por %p41, %p42
      %p44 = scmp.ne.s32.totalorder %s33, %s34
      %p45 = scmp.eq.s32.totalorder %s25, 0
      %p46 = por %p44, %p45
      %p47 = scmp.ne.s32.totalorder %s33, %s34
      %p48 = scmp.eq.s32.totalorder %s26, 1
      %p49 = por %p47, %p48
      %p51 = scmp.ne.s32.totalorder %s34, %s50
      %p52 = scmp.eq.s32.totalorder %s26, 0
      %p53 = por %p51, %p52
      %s54 = ssub.s32 %s20, %s27
      %p55 = scmp.eq.s32.totalorder %s54, 0
      %s57 = sadd.s32 %s56, 1
      %s58 = scalar_select %p55, %s56, %s57
      %p61 = pneg %p55
      %p62 = scmp.eq.s32.totalorder %s20, 1
      %p63 = por %p61, %p62
      %p64 = scmp.ne.s32.totalorder %s56, %s59
      %p65 = scmp.eq.s32.totalorder %s20, 0
      %p66 = por %p64, %p65
      %p67 = scmp.ne.s32.totalorder %s56, %s59
      %p68 = scmp.eq.s32.totalorder %s25, 1
      %p69 = por %p67, %p68
      %p70 = scmp.ne.s32.totalorder %s59, %s60
      %p71 = scmp.eq.s32.totalorder %s25, 0
      %p72 = por %p70, %p71
      %p73 = scmp.ne.s32.totalorder %s59, %s60
      %p74 = scmp.eq.s32.totalorder %s26, 1
      %p75 = por %p73, %p74
      %p77 = scmp.ne.s32.totalorder %s60, %s76
      %p78 = scmp.eq.s32.totalorder %s26, 0
      %p79 = por %p77, %p78
      %p80 = scmp.le.s32.totalorder 1, %s20
      %p81 = scmp.lt.s32.totalorder %s20, 3
      %p82 = pnand %p80, %p81
      %p83 = pneg %p82
      // Predicated region
      $region9: #{eca_block.1} parent=5 // pred_check
        _
      $region10: #{eca_block.1} parent=5 // pred_check_branch
        %85 = sbr.rel (%p82) target = $region12
      $region11: #{eca_block.1} parent=5 // pred_region
        %s86 = ssub.s32 %s20, 1
      $region12: #{eca_block.1} parent=5 // pred_fallthru
        _
      %p87 = scmp.lt.s32.totalorder %s20, 2
      // Predicated region
      $region13: #{eca_block.1} parent=5 // pred_check
        %p88 = pneg %p87
      $region14: #{eca_block.1} parent=5 // pred_check_branch
        %90 = sbr.rel (%p88) target = $region16
      $region15: #{eca_block.1} parent=5 // pred_region
        // Predicated region
        $region17: #{eca_block.1} parent=15 // pred_check
          %p91 = pneg %p40
        $region18: #{eca_block.1} parent=15 // pred_check_branch
          %93 = sbr.rel (%p91) target = $region20
        $region19: #{eca_block.1} parent=15 // pred_region
          %s94 = sand.u32 %s30, 1
          %s95 = scalar_lea.sflag [#allocation5], %s94
          %s96 = sand.u32 %s30, 1
          %s97 = smul.addr %s96, 8
          %s98 = scalar_lea.vmem [#allocation4], %s97
          %s100 = ssub.s32 128, 128
          %101 = vsyncadd %s95, %s100
          %s102 = smul.addr %s20, 128
          %s103 = scalar_lea.hbm %s1, %s102
          %s105 = sshll.u32 %s98, 4
          %s106 = int_to_ptr.vmem [resolvable:$true] %s105
          %108 = dma.hbm_to_vmem [thread:$0]  %s103, 128, %s106, %s95
        $region20: #{eca_block.1} parent=15 // pred_fallthru
          _
      $region16: #{eca_block.1} parent=5 // pred_fallthru
        _
      %p109 = scmp.le.s32.totalorder 1, %s20
      %p110 = scmp.lt.s32.totalorder %s20, 3
      %p111 = pnand %p109, %p110
      %p112 = pneg %p111
      // Predicated region
      $region21: #{eca_block.1} parent=5 // pred_check
        _
      $region22: #{eca_block.1} parent=5 // pred_check_branch
        %114 = sbr.rel (%p111) target = $region24
      $region23: #{eca_block.1} parent=5 // pred_region
        %s115 = ssub.s32 %s20, 1
        %s116 = sand.u32 %s33, 1
        %s117 = scalar_lea.sflag [#allocation5], %s116
        %s118 = sand.u32 %s33, 1
        %s119 = smul.addr %s118, 8
        %s120 = scalar_lea.vmem [#allocation4], %s119
        // Predicated region
        $region25: #{eca_block.1} parent=23 // pred_check
          %p121 = pneg %p46
        $region26: #{eca_block.1} parent=23 // pred_check_branch
          %123 = sbr.rel (%p121) target = $region28
        $region27: #{eca_block.1} parent=23 // pred_region
          %124 = dma.done %s117, 128
        $region28: #{eca_block.1} parent=23 // pred_fallthru
          _
        %s125 = sand.u32 %s33, 1
        %s126 = scalar_lea.sflag [#allocation5], %s125
        %s127 = sand.u32 %s33, 1
        %s128 = smul.addr %s127, 8
        %s129 = scalar_lea.vmem [#allocation4], %s128
        %p130 = pneg %p46
        %p131 = pneg %p43
        %p132 = pneg %p72
        %p133 = pneg %p69
        %s134 = sand.u32 %s59, 1
        %s135 = scalar_lea.sflag [#allocation6], %s134
        %s136 = sand.u32 %s59, 1
        %s137 = smul.addr %s136, 8
        %s138 = scalar_lea.vmem [#allocation7], %s137
        %v139 = vld [vmem:[%s120] sm:$0xff]
        %vm140 = vcmask 130048
        %v141 = vsel %vm140, %v139, 0.0
        %142 = vadd.xlane.f32.xlu0 %v141
        %v143 = vpop.xlane.xlu0 %142
        %v144 = vlaneseq
        %v145 = vshrl.u32 %v144, 7
        %s146 = sld [smem:[#allocation3]]
        %v147 = vrot.slane %v143, 7
        %vm148 = vcmp.ge.s32.totalorder %v145, 1
        %vm149 = vcmp.lt.s32.totalorder %v145, 9
        %vm150 = vmand %vm148, %vm149
        %v151 = vsel %vm150, %v147, 0.0
        %v152 = vstv %s146
        %v153 = vmul.f32 %v152, %v151
        %v154 = vadd.f32 %v153, 0.0
        %s155 = sld [smem:[#allocation3 + $0x1]]
        %v156 = vstv %s155
        %v157 = vmul.f32 %v156, %v143
        %v158 = vadd.f32 %v154, %v157
        %s159 = sld [smem:[#allocation3 + $0x2]]
        %v160 = vrot.slane %v143, 1
        %vm161 = vcmp.ge.s32.totalorder %v145, 4294967295
        %vm162 = vcmp.lt.s32.totalorder %v145, 7
        %vm163 = vmand %vm161, %vm162
        %v164 = vsel %vm163, %v160, 0.0
        %v165 = vstv %s159
        %v166 = vmul.f32 %v165, %v164
        %v167 = vadd.f32 %v158, %v166
        %v168 = vxor.u32 %v167, 2147483648
        %v169 = vmul.f32 %v168, 1.442695
        %v170 = vpow.pop %v169
        %v171 = vadd.f32 %v170, 1.0
        %v172 = vrcp.pop %v171
        %v173 = vmul.f32 1.0, %v172
        %175 = vset.pattern.permute.xlu0 0
        %176 = vperm.xlu0 %175, %v173
        %v177 = vpop.permute.xlu0 %176
        %v179 = vmul.f32 %v139, %v177
        %180 = vst.msk [vmem:[%s138] sm:$0xff] %vm140, %v179
        %s181 = sand.u32 %s59, 1
        %s182 = scalar_lea.sflag [#allocation6], %s181
        %s183 = sand.u32 %s59, 1
        %s184 = smul.addr %s183, 8
        %s185 = scalar_lea.vmem [#allocation7], %s184
        // Predicated region
        $region29: #{eca_block.1} parent=23 // pred_check
          %p186 = pneg %p69
        $region30: #{eca_block.1} parent=23 // pred_check_branch
          %188 = sbr.rel (%p186) target = $region32
        $region31: #{eca_block.1} parent=23 // pred_region
          %s190 = ssub.s32 128, 128
          %191 = vsyncadd %s182, %s190
          %s192 = smul.addr %s25, 128
          %s193 = scalar_lea.hbm %s2, %s192
          %s195 = sshll.u32 %s185, 4
          %s196 = int_to_ptr.vmem [resolvable:$true] %s195
          %198 = dma.vmem_to_hbm [thread:$0]  %s196, 128, %s193, %s182
        $region32: #{eca_block.1} parent=23 // pred_fallthru
          _
      $region24: #{eca_block.1} parent=5 // pred_fallthru
        _
      %p199 = scmp.le.s32.totalorder 2, %s20
      // Predicated region
      $region33: #{eca_block.1} parent=5 // pred_check
        %p200 = pneg %p199
      $region34: #{eca_block.1} parent=5 // pred_check_branch
        %202 = sbr.rel (%p200) target = $region36
      $region35: #{eca_block.1} parent=5 // pred_region
        %s203 = ssub.s32 %s20, 2
        // Predicated region
        $region37: #{eca_block.1} parent=35 // pred_check
          %p204 = pneg %p75
        $region38: #{eca_block.1} parent=35 // pred_check_branch
          %206 = sbr.rel (%p204) target = $region40
        $region39: #{eca_block.1} parent=35 // pred_region
          %s207 = sand.u32 %s60, 1
          %s208 = scalar_lea.sflag [#allocation6], %s207
          %s209 = sand.u32 %s60, 1
          %s210 = smul.addr %s209, 8
          %s211 = scalar_lea.vmem [#allocation7], %s210
          %212 = dma.done %s208, 128
        $region40: #{eca_block.1} parent=35 // pred_fallthru
          _
      $region36: #{eca_block.1} parent=5 // pred_fallthru
        _
    $region6: #{eca_block.1} parent=1 // loop_footer
      %s24 = sadd.s32 1, %s20
    $region7: #{eca_block.1} parent=1 // loop_footer_branch
      %19 = sbr.rel target = $region3
    $region8: #{eca_block.1} parent=1 // loop_exit
      _
    %213 = vsyncpa [#allocation5], 1
    %s214 = scalar_lea.sflag [#allocation5], 1
    %215 = vsyncpa %s214, 1
    %216 = vsyncpa [#allocation6], 1
    %s217 = scalar_lea.sflag [#allocation6], 1
    %218 = vsyncpa %s217, 1

</llo_original>
